<compile_context>
chip_gen: v7x
topology: tpu7x:2x2x1
jax: 0.10.0
libtpu: 0.0.40
codegen_flags: <defaults>
</compile_context>

<pallas_src>
import jax
import jax.numpy as jnp
from jax.experimental import pallas as pl
from jax.experimental.pallas import tpu as pltpu


def _norm_kernel(scale_ref, bias_ref, img_ref, out_ref):
    # out = img * (1/std) + (-mean/std); (rows_tile, 1) scale/bias broadcast
    # against the lane-dense (rows_tile, H*W) image block. Pure VPU mul+add.
    out_ref[...] = img_ref[...] * scale_ref[...] + bias_ref[...]


def _pick_rows_tile(rows, row_bytes, target_bytes=2 * 1024 * 1024):
    """Largest row tile (multiple of 8, or the full extent) giving ~target_bytes blocks."""
    max_rows = max(1, target_bytes // max(row_bytes, 1))
    if max_rows >= rows:
        return rows                       # block == full array extent (always legal)
    t = (max_rows // 8) * 8               # keep the sublane dim a multiple of 8
    if t == 0:
        t = 8                             # minimum legal tile when a single row is large
    return min(t, rows)


def normalization(image, mean, std):
    """image: [B, C, H, W]; mean/std: [C] -> (image - mean[:,None,None]) / std[:,None,None]."""
    B, C, H, W = image.shape
    dtype = image.dtype

    mean = jnp.asarray(mean, dtype=dtype).reshape(C)
    std = jnp.asarray(std, dtype=dtype).reshape(C)

    # Precompute per-channel affine so the kernel avoids a per-element divide.
    scale = 1.0 / std                     # [C]
    bias = -mean * scale                  # [C]

    rows = B * C
    cols = H * W

    # Contiguous NCHW reshape: minor dim becomes the full H*W plane (lane-dense).
    img2d = image.reshape(rows, cols)
    scale_rows = jnp.tile(scale, B).reshape(rows, 1)   # row r -> channel r % C
    bias_rows = jnp.tile(bias, B).reshape(rows, 1)

    rows_tile = _pick_rows_tile(rows, cols * dtype.itemsize)
    grid = (pl.cdiv(rows, rows_tile),)

    out2d = pl.pallas_call(
        _norm_kernel,
        out_shape=jax.ShapeDtypeStruct((rows, cols), dtype),
        grid_spec=pltpu.PrefetchScalarGridSpec(
            num_scalar_prefetch=0,
            grid=grid,
            in_specs=[
                pl.BlockSpec((rows_tile, 1), lambda i: (i, 0)),     # per-row scale
                pl.BlockSpec((rows_tile, 1), lambda i: (i, 0)),     # per-row bias
                pl.BlockSpec((rows_tile, cols), lambda i: (i, 0)),  # image block
            ],
            out_specs=pl.BlockSpec((rows_tile, cols), lambda i: (i, 0)),
        ),
        compiler_params=pltpu.CompilerParams(
            dimension_semantics=("parallel",),
        ),
    )(scale_rows, bias_rows, img2d)

    return out2d.reshape(B, C, H, W)


if __name__ == "__main__":
    key = jax.random.PRNGKey(0)

    B, C, H, W = 2, 3, 16, 16
    image = jax.random.normal(key, (B, C, H, W), dtype=jnp.float32)

    # Deterministic parameters (classic ImageNet-style constants for C=3).
    mean = jnp.array([0.485, 0.456, 0.406], dtype=jnp.float32)
    std = jnp.array([0.229, 0.224, 0.225], dtype=jnp.float32)

    out = normalization(image, mean, std)
    out = jax.block_until_ready(out)

    # Reference check (plain JAX, mirrors PyTorch broadcasting [C, 1, 1]).
    ref = (image - mean.reshape(C, 1, 1)) / std.reshape(C, 1, 1)
    assert out.shape == (B, C, H, W)
    assert jnp.allclose(out, ref, atol=1e-5, rtol=1e-5), float(jnp.max(jnp.abs(out - ref)))

    print("KERNEL_OK")
</pallas_src>

<mosaic_0001>
module attributes {stable_mosaic.version = 11 : i64} {
  func.func @_norm_kernel(%arg0: i32, %arg1: memref<6x1xf32, #tpu.memory_space<vmem>>, %arg2: memref<6x1xf32, #tpu.memory_space<vmem>>, %arg3: memref<6x256xf32, #tpu.memory_space<vmem>>, %arg4: memref<6x256xf32, #tpu.memory_space<vmem>>) attributes {dimension_semantics = [#tpu.dimension_semantics<parallel>], iteration_bounds = array<i64: 1>, scalar_prefetch = 0 : i64, scratch_operands = 0 : i64, tpu.core_type = #tpu.core_type<tc>, window_params = [{transform_indices = @transform_0, window_bounds = array<i64: 6, 1>}, {transform_indices = @transform_1, window_bounds = array<i64: 6, 1>}, {transform_indices = @transform_2, window_bounds = array<i64: 6, 256>}, {transform_indices = @transform_3, window_bounds = array<i64: 6, 256>}]} {
    %c0 = arith.constant 0 : index
    %c0_0 = arith.constant 0 : index
    %0 = vector.load %arg3[%c0, %c0_0] : memref<6x256xf32, #tpu.memory_space<vmem>>, vector<6x256xf32>
    %c0_1 = arith.constant 0 : index
    %c0_2 = arith.constant 0 : index
    %1 = vector.load %arg1[%c0_1, %c0_2] : memref<6x1xf32, #tpu.memory_space<vmem>>, vector<6x1xf32>
    %2 = vector.broadcast %1 : vector<6x1xf32> to vector<6x256xf32>
    %3 = arith.mulf %0, %2 : vector<6x256xf32>
    %c0_3 = arith.constant 0 : index
    %c0_4 = arith.constant 0 : index
    %4 = vector.load %arg2[%c0_3, %c0_4] : memref<6x1xf32, #tpu.memory_space<vmem>>, vector<6x1xf32>
    %5 = vector.broadcast %4 : vector<6x1xf32> to vector<6x256xf32>
    %6 = arith.addf %3, %5 : vector<6x256xf32>
    %c0_5 = arith.constant 0 : index
    %c0_6 = arith.constant 0 : index
    %7 = vector.load %arg4[%c0_5, %c0_6] : memref<6x256xf32, #tpu.memory_space<vmem>>, vector<6x256xf32>
    tpu.vector_store %arg4[%c0_5, %c0_6], %6 {strides = array<i32>} : memref<6x256xf32, #tpu.memory_space<vmem>>, vector<6x256xf32>,
    return
  }
  func.func @transform_0(%arg0: i32) -> (i32, i32) {
    %c0_i32 = arith.constant 0 : i32
    %c0_i32_0 = arith.constant 0 : i32
    return %arg0, %c0_i32 : i32, i32
  }
  func.func @transform_1(%arg0: i32) -> (i32, i32) {
    %c0_i32 = arith.constant 0 : i32
    %c0_i32_0 = arith.constant 0 : i32
    return %arg0, %c0_i32 : i32, i32
  }
  func.func @transform_2(%arg0: i32) -> (i32, i32) {
    %c0_i32 = arith.constant 0 : i32
    %c0_i32_0 = arith.constant 0 : i32
    return %arg0, %c0_i32 : i32, i32
  }
  func.func @transform_3(%arg0: i32) -> (i32, i32) {
    %c0_i32 = arith.constant 0 : i32
    %c0_i32_0 = arith.constant 0 : i32
    return %arg0, %c0_i32 : i32, i32
  }
}

</mosaic_0001>

<llo_original>
// kernel: tpu_custom_call.1
$region0: #{tpu_custom_call.1}
  #allocation0 [shape = 'u32[]', space=smem, size = 0x4, offset = 0x4, fixed_abs, tag = 'smem constant byte address 0x4 - core index']
  #allocation1 [shape = 'u32[144,128]{1,0:T(1,128)}', space=vmem, size = 0x12000, scoped, tag = 'internal scratch']
  %s0 = inlined_call_operand.vmem [shape: f32[6,1], index: 0, kind: input, shape index: {}]
  %s1 = inlined_call_operand.vmem [shape: f32[6,1], index: 1, kind: input, shape index: {}]
  %s2 = inlined_call_operand.vmem [shape: f32[6,256], index: 2, kind: input, shape index: {}]
  %s3 = inlined_call_operand.hbm [shape: f32[6,256], index: 3, kind: output, shape index: {}]
  %s4 = sld [smem:[#allocation0]]
  $region22: #{tpu_custom_call.1} parent=0
    _
  %s6 = ssub.s32 1, %s4
  %s7 = scalar_select 0, %s6, %s4
  $region1: #{tpu_custom_call.1} parent=0
    #allocation2 [shape = 'u8[8192]{0}', space=vmem, size = 0x2000, scoped, tag = 'output window, operand 0, single buffered']
    #allocation3 [shape = 's32[1]{0}', space=sflag, size = 0x4, scoped, tag = 'scoped memory for tpu_custom_call.1']
    %8 = vsyncpa [#allocation3], 0
    // Predicated region
    $region2: #{tpu_custom_call.1} parent=1 // pred_check
      _
    $region3: #{tpu_custom_call.1} parent=1 // pred_check_branch
      %10 = sbr.rel (0) target = $region5
    $region4: #{tpu_custom_call.1} parent=1 // pred_region
      _
    $region5: #{tpu_custom_call.1} parent=1 // pred_fallthru
      _
    // Predicated region
    $region6: #{tpu_custom_call.1} parent=1 // pred_check
      _
    $region7: #{tpu_custom_call.1} parent=1 // pred_check_branch
      %12 = sbr.rel (0) target = $region9
    $region8: #{tpu_custom_call.1} parent=1 // pred_region
      _
    $region9: #{tpu_custom_call.1} parent=1 // pred_fallthru
      _
    // Predicated region
    $region10: #{tpu_custom_call.1} parent=1 // pred_check
      _
    $region11: #{tpu_custom_call.1} parent=1 // pred_check_branch
      %14 = sbr.rel (0) target = $region13
    $region12: #{tpu_custom_call.1} parent=1 // pred_region
      _
    $region13: #{tpu_custom_call.1} parent=1 // pred_fallthru
      _
    %v15 = vld [vmem:[%s2] sm:$0x3f]
    %v16 = vld [vmem:[%s2 + $0x8] sm:$0x3f]
    %v17 = vld [vmem:[%s0] sm:$0x3f]
    %19 = vset.pattern.permute.xlu0 0
    %20 = vperm.xlu0 %19, %v17
    %v21 = vpop.permute.xlu0 %20
    %v23 = vmul.f32 %v15, %v21
    %v24 = vmul.f32 %v16, %v21
    %v25 = vld [vmem:[%s1] sm:$0x3f]
    %27 = vset.pattern.permute.xlu0 0
    %28 = vperm.xlu0 %27, %v25
    %v29 = vpop.permute.xlu0 %28
    %v31 = vadd.f32 %v23, %v29
    %v32 = vadd.f32 %v24, %v29
    %33 = vst [vmem:[#allocation2] sm:$0x3f] %v31
    %34 = vst [vmem:[#allocation2 + $0x8] sm:$0x3f] %v32
    // Predicated region
    $region14: #{tpu_custom_call.1} parent=1 // pred_check
      _
    $region15: #{tpu_custom_call.1} parent=1 // pred_check_branch
      %36 = sbr.rel (0) target = $region17
    $region16: #{tpu_custom_call.1} parent=1 // pred_region
      %s38 = ssub.s32 256, 256
      %39 = vsyncadd [#allocation3], %s38
      %s41 = sshll.u32 [#allocation2], 4
      %s42 = int_to_ptr.vmem [resolvable:$true] %s41
      %44 = dma.vmem_to_hbm [thread:$0]  %s42, 256, %s3, [#allocation3]
    $region17: #{tpu_custom_call.1} parent=1 // pred_fallthru
      _
    // Predicated region
    $region18: #{tpu_custom_call.1} parent=1 // pred_check
      _
    $region19: #{tpu_custom_call.1} parent=1 // pred_check_branch
      %46 = sbr.rel (0) target = $region21
    $region20: #{tpu_custom_call.1} parent=1 // pred_region
      %47 = dma.done [#allocation3], 256
    $region21: #{tpu_custom_call.1} parent=1 // pred_fallthru
      _
    %48 = vsyncpa [#allocation3], 1

</llo_original>
